<compile_context>
chip_gen: v7x
topology: tpu7x:2x2x1
jax: 0.10.0
libtpu: 0.0.40
codegen_flags: <defaults>
</compile_context>

<pallas_src>
import jax
import jax.numpy as jnp
from jax.experimental import pallas as pl
from jax.experimental.pallas import tpu as pltpu


_NCHUNKS_MAX = 4          # outstanding DMA pairs per grid step (perf review: 4-8)
_MIN_TOTAL_BYTES = 1 << 20  # below this, kernel-launch overhead dominates
_MIN_ROW_BYTES = 512        # below this, strided HBM bursts waste bandwidth


def _make_cat_depth_dma_kernel(rows_per_step: int, sx: int, sy: int):
    """Build a kernel copying `rows_per_step` batch rows per grid step.

    The row range owned by one grid step is split into up to _NCHUNKS_MAX
    statically-sized chunks; all chunk DMAs (x-slab and y-slab) are started
    before any wait so the copy engine always has multiple transfers in
    flight.
    """
    n_chunks = max(1, min(rows_per_step, _NCHUNKS_MAX))
    base = rows_per_step // n_chunks
    rem = rows_per_step % n_chunks
    chunks = []
    r = 0
    for c in range(n_chunks):
        size = base + (1 if c < rem else 0)
        chunks.append((r, size))
        r += size

    def kernel(x_hbm, y_hbm, o_hbm, sem):
        # x_hbm: (N, SX), y_hbm: (N, SY), o_hbm: (N, SX+SY) -- raw HBM refs.
        row_base = pl.program_id(0) * rows_per_step

        copies = []
        for c, (off, size) in enumerate(chunks):
            r0 = row_base + off
            cp_x = pltpu.make_async_copy(
                x_hbm.at[pl.ds(r0, size), :],
                o_hbm.at[pl.ds(r0, size), pl.ds(0, sx)],
                sem.at[0, c],
            )
            cp_y = pltpu.make_async_copy(
                y_hbm.at[pl.ds(r0, size), :],
                o_hbm.at[pl.ds(r0, size), pl.ds(sx, sy)],
                sem.at[1, c],
            )
            cp_x.start()
            cp_y.start()
            copies.append(cp_x)
            copies.append(cp_y)

        # All 2 * n_chunks DMAs are in flight; only now drain them.
        for cp in copies:
            cp.wait()

    return kernel, n_chunks


def cat_depth(x: jax.Array, y: jax.Array, *, force_pallas: bool = False) -> jax.Array:
    """Equivalent of torch.cat([x, y], dim=1) for NCHW tensors."""
    assert x.ndim == 4 and y.ndim == 4, "expected NCHW inputs"
    n, c1, h, w = x.shape
    n2, c2, h2, w2 = y.shape
    assert (n, h, w) == (n2, h2, w2), "non-channel dims must match"
    assert x.dtype == y.dtype
    assert n >= 1

    sx = c1 * h * w
    sy = c2 * h * w
    itemsize = jnp.dtype(x.dtype).itemsize
    total_bytes = (x.size + y.size) * itemsize

    if not force_pallas and (
        total_bytes < _MIN_TOTAL_BYTES
        or sx * itemsize < _MIN_ROW_BYTES
        or sy * itemsize < _MIN_ROW_BYTES
    ):
        # Tiny totals: custom-call dispatch dominates.  Tiny rows: strided
        # HBM->HBM bursts are inefficient.  XLA's native concatenate copy is
        # as good or better in both regimes.
        return jnp.concatenate([x, y], axis=1)

    # Free metadata reshape for (default, row-major) contiguous NCHW: the
    # channel concat becomes one contiguous slab per batch row, so every DMA
    # is a long burst and the concat boundary lands on a slab boundary.
    x2 = x.reshape(n, sx)
    y2 = y.reshape(n, sy)

    # Grid: 2 parallel steps when the batch splits evenly (engages both v7x
    # TensorCores; one cheap extra iteration on single-core v5e/v6e), else a
    # single step covering all rows.
    g = 2 if (n >= 2 and n % 2 == 0) else 1
    rows_per_step = n // g
    kernel, n_chunks = _make_cat_depth_dma_kernel(rows_per_step, sx, sy)

    out2 = pl.pallas_call(
        kernel,
        out_shape=jax.ShapeDtypeStruct((n, sx + sy), x.dtype),
        grid=(g,),
        in_specs=[
            pl.BlockSpec(memory_space=pl.ANY),  # x stays in HBM; DMA'd directly.
            pl.BlockSpec(memory_space=pl.ANY),  # y stays in HBM; DMA'd directly.
        ],
        out_specs=pl.BlockSpec(memory_space=pl.ANY),  # written via DMA only.
        scratch_shapes=[pltpu.SemaphoreType.DMA((2, n_chunks))],
        compiler_params=pltpu.CompilerParams(
            dimension_semantics=("parallel",),
        ),
        # Pure bandwidth-bound op: read x+y bytes, write the same byte count.
        cost_estimate=pl.CostEstimate(
            flops=0,
            transcendentals=0,
            bytes_accessed=2 * total_bytes,
        ),
    )(x2, y2)

    return out2.reshape(n, c1 + c2, h, w)


if __name__ == "__main__":
    key = jax.random.PRNGKey(0)
    kx, ky = jax.random.split(key)

    # Small NCHW shapes consistent with the module's forward pass.
    x = jax.random.normal(kx, (2, 4, 16, 16), dtype=jnp.float32)
    y = jax.random.normal(ky, (2, 4, 16, 16), dtype=jnp.float32)
    ref = jnp.concatenate([x, y], axis=1)

    # Exercise the Pallas DMA kernel (force past the small-size fast path):
    # even batch -> grid=(2,), one row per step.
    out = jax.block_until_ready(cat_depth(x, y, force_pallas=True))
    assert out.shape == (2, 8, 16, 16), out.shape
    assert jnp.array_equal(out, ref), "mismatch vs reference concatenate"

    # Odd batch + unequal channel counts -> single grid step, per-row chunking.
    x3 = jax.random.normal(kx, (3, 4, 16, 16), dtype=jnp.float32)
    y3 = jax.random.normal(ky, (3, 6, 16, 16), dtype=jnp.float32)
    out3 = jax.block_until_ready(cat_depth(x3, y3, force_pallas=True))
    assert jnp.array_equal(out3, jnp.concatenate([x3, y3], axis=1)), "odd-batch mismatch"

    # Default wrapper path (small-size fast path via XLA concat) matches too.
    out_fast = jax.block_until_ready(cat_depth(x, y))
    assert jnp.array_equal(out_fast, ref), "fast-path mismatch"

    print("KERNEL_OK")
</pallas_src>

<mosaic_0001>
module attributes {stable_mosaic.version = 11 : i64} {
  func.func @kernel(%arg0: i32, %arg1: memref<2x1024xf32, #tpu.memory_space<any>>, %arg2: memref<2x1024xf32, #tpu.memory_space<any>>, %arg3: memref<2x2048xf32, #tpu.memory_space<any>>, %arg4: memref<2x1x!tpu.dma_semaphore, #tpu.memory_space<semaphore_mem>>) attributes {dimension_semantics = [#tpu.dimension_semantics<parallel>], iteration_bounds = array<i64: 2>, scalar_prefetch = 0 : i64, scratch_operands = 1 : i64, tpu.core_type = #tpu.core_type<tc>, window_params = [{}, {}, {}]} {
    %c1_i32 = arith.constant 1 : i32
    %0 = arith.muli %arg0, %c1_i32 : i32
    %c0_i32 = arith.constant 0 : i32
    %1 = arith.addi %0, %c0_i32 : i32
    %c0_i32_0 = arith.constant 0 : i32
    %c0_i32_1 = arith.constant 0 : i32
    %c0_i32_2 = arith.constant 0 : i32
    %2 = tpu.memref_slice %arg1[%1, %c0_i32_2] : memref<2x1024xf32, #tpu.memory_space<any>> -> memref<1x1024xf32, #tpu.memory_space<any>>
    %c0_i32_3 = arith.constant 0 : i32
    %3 = tpu.memref_slice %arg3[%1, %c0_i32_3] : memref<2x2048xf32, #tpu.memory_space<any>> -> memref<1x1024xf32, #tpu.memory_space<any>>
    %4 = tpu.memref_slice %arg4[%c0_i32_0, %c0_i32_1] : memref<2x1x!tpu.dma_semaphore, #tpu.memory_space<semaphore_mem>> -> memref<1x1x!tpu.dma_semaphore, #tpu.memory_space<semaphore_mem>>
    %5 = tpu.memref_squeeze %4 : memref<1x1x!tpu.dma_semaphore, #tpu.memory_space<semaphore_mem>> -> memref<!tpu.dma_semaphore, #tpu.memory_space<semaphore_mem>>
    tpu.enqueue_dma source(%2 : memref<1x1024xf32, #tpu.memory_space<any>>) target(%3 : memref<1x1024xf32, #tpu.memory_space<any>>) target_semaphore(%5 : memref<!tpu.dma_semaphore, #tpu.memory_space<semaphore_mem>>)
    %c1_i32_4 = arith.constant 1 : i32
    %c0_i32_5 = arith.constant 0 : i32
    %c0_i32_6 = arith.constant 0 : i32
    %6 = tpu.memref_slice %arg2[%1, %c0_i32_6] : memref<2x1024xf32, #tpu.memory_space<any>> -> memref<1x1024xf32, #tpu.memory_space<any>>
    %c1024_i32 = arith.constant 1024 : i32
    %7 = tpu.memref_slice %arg3[%1, %c1024_i32] : memref<2x2048xf32, #tpu.memory_space<any>> -> memref<1x1024xf32, #tpu.memory_space<any>>
    %8 = tpu.memref_slice %arg4[%c1_i32_4, %c0_i32_5] : memref<2x1x!tpu.dma_semaphore, #tpu.memory_space<semaphore_mem>> -> memref<1x1x!tpu.dma_semaphore, #tpu.memory_space<semaphore_mem>>
    %9 = tpu.memref_squeeze %8 : memref<1x1x!tpu.dma_semaphore, #tpu.memory_space<semaphore_mem>> -> memref<!tpu.dma_semaphore, #tpu.memory_space<semaphore_mem>>
    tpu.enqueue_dma source(%6 : memref<1x1024xf32, #tpu.memory_space<any>>) target(%7 : memref<1x1024xf32, #tpu.memory_space<any>>) target_semaphore(%9 : memref<!tpu.dma_semaphore, #tpu.memory_space<semaphore_mem>>)
    %c0_i32_7 = arith.constant 0 : i32
    %c0_i32_8 = arith.constant 0 : i32
    %c0_i32_9 = arith.constant 0 : i32
    %10 = tpu.memref_slice %arg1[%1, %c0_i32_9] : memref<2x1024xf32, #tpu.memory_space<any>> -> memref<1x1024xf32, #tpu.memory_space<any>>
    %c0_i32_10 = arith.constant 0 : i32
    %11 = tpu.memref_slice %arg3[%1, %c0_i32_10] : memref<2x2048xf32, #tpu.memory_space<any>> -> memref<1x1024xf32, #tpu.memory_space<any>>
    %12 = tpu.memref_slice %arg4[%c0_i32_7, %c0_i32_8] : memref<2x1x!tpu.dma_semaphore, #tpu.memory_space<semaphore_mem>> -> memref<1x1x!tpu.dma_semaphore, #tpu.memory_space<semaphore_mem>>
    %13 = tpu.memref_squeeze %12 : memref<1x1x!tpu.dma_semaphore, #tpu.memory_space<semaphore_mem>> -> memref<!tpu.dma_semaphore, #tpu.memory_space<semaphore_mem>>
    tpu.wait_dma2 semaphore(%13 : memref<!tpu.dma_semaphore, #tpu.memory_space<semaphore_mem>>) src(%10 : memref<1x1024xf32, #tpu.memory_space<any>>) dst(%11 : memref<1x1024xf32, #tpu.memory_space<any>>)
    %c1_i32_11 = arith.constant 1 : i32
    %c0_i32_12 = arith.constant 0 : i32
    %c0_i32_13 = arith.constant 0 : i32
    %14 = tpu.memref_slice %arg2[%1, %c0_i32_13] : memref<2x1024xf32, #tpu.memory_space<any>> -> memref<1x1024xf32, #tpu.memory_space<any>>
    %c1024_i32_14 = arith.constant 1024 : i32
    %15 = tpu.memref_slice %arg3[%1, %c1024_i32_14] : memref<2x2048xf32, #tpu.memory_space<any>> -> memref<1x1024xf32, #tpu.memory_space<any>>
    %16 = tpu.memref_slice %arg4[%c1_i32_11, %c0_i32_12] : memref<2x1x!tpu.dma_semaphore, #tpu.memory_space<semaphore_mem>> -> memref<1x1x!tpu.dma_semaphore, #tpu.memory_space<semaphore_mem>>
    %17 = tpu.memref_squeeze %16 : memref<1x1x!tpu.dma_semaphore, #tpu.memory_space<semaphore_mem>> -> memref<!tpu.dma_semaphore, #tpu.memory_space<semaphore_mem>>
    tpu.wait_dma2 semaphore(%17 : memref<!tpu.dma_semaphore, #tpu.memory_space<semaphore_mem>>) src(%14 : memref<1x1024xf32, #tpu.memory_space<any>>) dst(%15 : memref<1x1024xf32, #tpu.memory_space<any>>)
    return
  }
}

</mosaic_0001>

<llo_original>
// kernel: tpu_custom_call.1
$region0: #{tpu_custom_call.1}
  #allocation0 [shape = 'u32[]', space=smem, size = 0x4, offset = 0x4, fixed_abs, tag = 'smem constant byte address 0x4 - core index']
  #allocation1 [shape = 'u32[144,128]{1,0:T(1,128)}', space=vmem, size = 0x12000, scoped, tag = 'internal scratch']
  #allocation2 [shape = 's32[2]{0}', space=sflag, size = 0x8, scoped, tag = 'scratch operand']
  #allocation3 [shape = 's32[]', space=sflag, size = 0x4, offset = 0, fixed_abs, tag = 'sflag constant byte address 0x0 - dummy sync flag']
  #allocation5 [shape = 's32[]', space=sflag, size = 0x4, offset = 0, fixed_abs, tag = 'sflag constant byte address 0x0 - dummy sync flag']
  %s0 = inlined_call_operand.hbm [shape: f32[2,1024], index: 0, kind: input, shape index: {}]
  %s1 = inlined_call_operand.hbm [shape: f32[2,1024], index: 1, kind: input, shape index: {}]
  %s2 = inlined_call_operand.hbm [shape: f32[2,2048], index: 2, kind: output, shape index: {}]
  %s3 = sld [smem:[#allocation0]]
  $region9: #{tpu_custom_call.1} parent=0
    _
  %s5 = ssub.s32 1, %s3
  %s6 = scalar_select 0, %s5, %s3
  loop: start=0, step=1, limit=2
  $region2: #{tpu_custom_call.1} parent=0 // loop_pre_header
    _
  $region3: #{tpu_custom_call.1} parent=0 // loop_header
    %s8 = sphi 0, %s12
    %p9 = scmp.ge.s32.totalorder %s8, 2
  $region4: #{tpu_custom_call.1} parent=0 // loop_header_branch
    %11 = sbr.rel (%p9) target = $region8
  $region5: #{tpu_custom_call.1} parent=0 // loop_body
    #allocation4 [shape = 'u32[3]{0}', space=smem, size = 0xc, scoped, tag = 'DMA stride descriptor']
    #allocation6 [shape = 'u32[3]{0}', space=smem, size = 0xc, scoped, tag = 'DMA stride descriptor']
    %s13 = sadd.s32 %s8, 1
    %s14 = sshrl.u32 %s8, 1
    %s15 = sand.u32 %s8, 1
    %s16 = smul.u32 %s14, 16
    %s17 = sadd.s32 %s15, %s16
    %s18 = smul.addr %s17, 16
    %s19 = scalar_lea.hbm %s0, %s18
    %s20 = smul.u32 %s14, 32
    %s21 = sadd.s32 %s15, %s20
    %s22 = smul.addr %s21, 16
    %s23 = scalar_lea.hbm %s2, %s22
    %s25 = sshll.u32 1, 14
    %s26 = sxor.u32 4294967295, %s25
    %s29 = sshll.u32 3, 24
    %s30 = sxor.u32 4294967295, %s29
    %s31 = sand.u32 0, %s30
    %s33 = sor.u32 %s31, 0
    %36 = sst [smem:[#allocation4]] 32
    %s37 = scalar_lea.smem [#allocation4], 1
    %38 = sst [smem:[%s37]] 32
    %s39 = scalar_lea.smem [#allocation4], 2
    %40 = sst [smem:[%s39]] 1
    %42 = dma.general %s19, 128, %s23, [#allocation2], [#allocation3], [#allocation4], %s33, 0
    %s43 = smul.addr %s17, 16
    %s44 = scalar_lea.hbm %s1, %s43
    %s45 = sadd.s32 16, %s21
    %s46 = smul.addr %s45, 16
    %s47 = scalar_lea.hbm %s2, %s46
    %s48 = scalar_lea.sflag [#allocation2], 1
    %s50 = sshll.u32 1, 14
    %s51 = sxor.u32 4294967295, %s50
    %s54 = sshll.u32 3, 24
    %s55 = sxor.u32 4294967295, %s54
    %s56 = sand.u32 0, %s55
    %s58 = sor.u32 %s56, 0
    %61 = sst [smem:[#allocation6]] 32
    %s62 = scalar_lea.smem [#allocation6], 1
    %63 = sst [smem:[%s62]] 32
    %s64 = scalar_lea.smem [#allocation6], 2
    %65 = sst [smem:[%s64]] 1
    %67 = dma.general %s44, 128, %s47, %s48, [#allocation5], [#allocation6], %s58, 0
    %s68 = smul.u32 1, 8
    %s69 = sshll.u32 %s68, 4
    %70 = dma.done [#allocation2], %s69
    %s71 = sshll.u32 %s68, 4
    %72 = dma.done %s48, %s71
  $region6: #{tpu_custom_call.1} parent=0 // loop_footer
    %s12 = sadd.s32 1, %s8
  $region7: #{tpu_custom_call.1} parent=0 // loop_footer_branch
    %7 = sbr.rel target = $region3
  $region8: #{tpu_custom_call.1} parent=0 // loop_exit
    _
  %73 = vsyncmov [#allocation2]
  %s74 = vpop.sfrf %73
  %p75 = scmp.eq.s32.totalorder %s74, 0
  %p76 = pneg %p75
  %78 = shalt.err (%p76)
  %s79 = scalar_lea.sflag [#allocation2], 1
  %80 = vsyncmov %s79
  %s81 = vpop.sfrf %80
  %p82 = scmp.eq.s32.totalorder %s81, 0
  %p83 = pneg %p82
  %85 = shalt.err (%p83)

</llo_original>
